<compile_context>
chip_gen: v5e
topology: v5e:2x2
jax: 0.10.0
libtpu: 0.0.40
codegen_flags: <defaults>
</compile_context>

<pallas_src>
import functools

import jax
import jax.numpy as jnp
from jax import lax
from jax.experimental import pallas as pl
from jax.experimental.pallas import tpu as pltpu


def _res_a_down_kernel(*refs, sh, sw, th, wo, cin, cout, use_invc):
    """One grid step == one (batch sample, output-row tile).

    x_ref:     (sh, sw, th, wo, cin)  window offsets on leading dims
    w_ref:     (cin, cout)            1x1 conv weight (bf16, Cout padded to 128k)
    scale_ref: (1, cout)              folded BN scale (divisible case also holds
                                      the 1/(sh*sw) average divisor)
    shift_ref: (1, cout)              folded BN shift
    invc_ref:  (th, wo, 1)            1/valid_count  (only when use_invc)
    o_ref:     (th, wo, cout)
    """
    if use_invc:
        x_ref, w_ref, scale_ref, shift_ref, invc_ref, o_ref = refs
    else:
        x_ref, w_ref, scale_ref, shift_ref, o_ref = refs
        invc_ref = None

    # --- average-pool window sum: plain f32 adds over the leading (sh, sw)
    #     offsets; channels stay dense on the 128-lane axis throughout. ---
    acc = x_ref[0, 0].astype(jnp.float32)                      # (th, wo, cin)
    for di in range(sh):
        for dj in range(sw):
            if di == 0 and dj == 0:
                continue
            acc = acc + x_ref[di, dj].astype(jnp.float32)

    if use_invc:
        # count_include_pad=False on ragged edges: per-window reciprocal count,
        # laid out (th, wo, 1) so the multiply is a cheap lane broadcast.
        acc = acc * invc_ref[...]
    # (divisible case: the constant 1/(sh*sw) is already folded into scale_ref)

    # --- 1x1 conv on the MXU: bf16 inputs, f32 accumulation ---
    w = w_ref[...]
    flat = acc.reshape(th * wo, cin).astype(w.dtype)
    y = jnp.dot(flat, w, preferred_element_type=jnp.float32)   # (th*wo, cout)

    # --- folded BatchNorm (eval mode) ---
    y = y * scale_ref[...] + shift_ref[...]

    o_ref[...] = y.reshape(th, wo, cout).astype(o_ref.dtype)


def _as_pair(v):
    if isinstance(v, (tuple, list)):
        a, b = v
        return int(a), int(b)
    return int(v), int(v)


def _largest_divisor_leq(n, cap):
    cap = max(1, min(n, int(cap)))
    for d in range(cap, 0, -1):
        if n % d == 0:
            return d
    return 1


def res_a_down_block(x_nchw, weight, gamma, beta, running_mean, running_var,
                     *, stride, dilation=1, eps=1e-5, row_tile=None):
    """ResADownBlock forward. x_nchw: [N, Cin, H, W] (f32 or bf16) -> [N, Cout, Ho, Wo] f32."""
    N, Cin, H, W = x_nchw.shape
    Cout = weight.shape[0]

    if isinstance(dilation, (tuple, list)):
        dil_is_one = all(int(d) == 1 for d in dilation)
    else:
        dil_is_one = (dilation == 1)
    # torch: AvgPool2d(kernel=stride, stride=stride) if dilation == 1 else identity pool
    sh, sw = _as_pair(stride) if dil_is_one else (1, 1)

    Ho = -(-H // sh)                 # ceil_mode=True
    Wo = -(-W // sw)
    Hp, Wp = Ho * sh, Wo * sw
    divisible = (Hp == H) and (Wp == W)

    # --- layout: expose pooling-window offsets as leading dims ---------------
    # NCHW -> (N, C, Ho, sh, Wo, sw) -> (N, sh, sw, Ho, Wo, C).  One transpose
    # pass (same cost class as the unavoidable NCHW->channels-last pass); the
    # spatial pad is only emitted when ceil_mode actually creates partial windows.
    # TODO(synk): if the surrounding model already carries channels-last (NHWC)
    # activations, accept that layout directly and skip a full-layout transpose.
    xp = x_nchw
    if not divisible:
        xp = jnp.pad(xp, ((0, 0), (0, 0), (0, Hp - H), (0, Wp - W)))
    x = xp.reshape(N, Cin, Ho, sh, Wo, sw).transpose(0, 3, 5, 2, 4, 1)
    x_item = x.dtype.itemsize

    # --- lane-dense output channels (no-op at real ResNet widths) ------------
    Cout_p = -(-Cout // 128) * 128

    # 1x1 conv weight [Cout, Cin, 1, 1] -> [Cin, Cout_p], bf16 for the MXU.
    w2 = weight.reshape(Cout, Cin).T.astype(jnp.float32)
    w2 = jnp.pad(w2, ((0, 0), (0, Cout_p - Cout))).astype(jnp.bfloat16)

    # Fold BN (eval) into scale/shift; fold the constant average divisor into
    # the scale when every pooling window is full.
    inv_std = 1.0 / jnp.sqrt(running_var.astype(jnp.float32) + eps)
    scale = gamma.astype(jnp.float32) * inv_std
    shift = beta.astype(jnp.float32) - running_mean.astype(jnp.float32) * scale
    if divisible:
        scale = scale / float(sh * sw)
    scale_p = jnp.pad(scale, (0, Cout_p - Cout)).reshape(1, Cout_p)
    shift_p = jnp.pad(shift, (0, Cout_p - Cout)).reshape(1, Cout_p)

    inputs = [x, w2, scale_p, shift_p]
    use_invc = not divisible
    if use_invc:
        row_valid = jnp.minimum(sh, H - jnp.arange(Ho) * sh).astype(jnp.float32)
        col_valid = jnp.minimum(sw, W - jnp.arange(Wo) * sw).astype(jnp.float32)
        inv_count = (1.0 / (row_valid[:, None] * col_valid[None, :])).reshape(Ho, Wo, 1)
        inputs.append(inv_count)

    # --- choose the output-row tile TH so 2x double-buffered blocks plus
    #     in-kernel intermediates stay well under the scoped-VMEM limit. -------
    in_row = sh * sw * Wo * Cin * x_item            # input block bytes / out row
    out_row = Wo * Cout_p * 4                       # output block bytes / out row
    inter_row = Wo * Cin * 4 * 2 + Wo * Cin * 2 + Wo * Cout_p * 4
    per_row = 2 * in_row + 2 * out_row + inter_row + (2 * Wo * 4 if use_invc else 0)
    fixed = 2 * (Cin * Cout_p * 2 + 2 * Cout_p * 4)
    budget = 20 * 1024 * 1024                       # leave headroom under 32 MiB
    th_cap = max(1, (budget - fixed) // per_row)
    if row_tile is not None:
        th_cap = min(th_cap, int(row_tile))
    TH = _largest_divisor_leq(Ho, th_cap)           # keep blocks exactly tiling Ho
    n_row_tiles = Ho // TH

    kernel = functools.partial(
        _res_a_down_kernel, sh=sh, sw=sw, th=TH, wo=Wo, cin=Cin, cout=Cout_p,
        use_invc=use_invc)

    in_specs = [
        pl.BlockSpec((pl.Squeezed(), sh, sw, TH, Wo, Cin),
                     lambda n, r: (n, 0, 0, r, 0, 0)),
        pl.BlockSpec((Cin, Cout_p), lambda n, r: (0, 0)),
        pl.BlockSpec((1, Cout_p), lambda n, r: (0, 0)),
        pl.BlockSpec((1, Cout_p), lambda n, r: (0, 0)),
    ]
    if use_invc:
        in_specs.append(pl.BlockSpec((TH, Wo, 1), lambda n, r: (r, 0, 0)))

    flops = (2 * N * Ho * Wo * Cin * Cout_p        # 1x1 conv
             + N * Hp * Wp * Cin                   # pooling adds
             + 2 * N * Ho * Wo * Cout_p)           # BN scale/shift
    bytes_accessed = (x.size * x_item + w2.size * 2
                      + (scale_p.size + shift_p.size) * 4
                      + N * Ho * Wo * Cout_p * 4
                      + (Ho * Wo * 4 if use_invc else 0))

    out_nhwc = pl.pallas_call(
        kernel,
        out_shape=jax.ShapeDtypeStruct((N, Ho, Wo, Cout_p), jnp.float32),
        grid=(N, n_row_tiles),
        in_specs=in_specs,
        out_specs=pl.BlockSpec((pl.Squeezed(), TH, Wo, Cout_p),
                               lambda n, r: (n, r, 0, 0)),
        compiler_params=pltpu.CompilerParams(
            dimension_semantics=("parallel", "parallel"),
            vmem_limit_bytes=32 * 1024 * 1024),
        cost_estimate=pl.CostEstimate(
            flops=int(flops), transcendentals=0,
            bytes_accessed=int(bytes_accessed)),
    )(*inputs)

    # drop channel padding, back to NCHW
    return jnp.transpose(out_nhwc[..., :Cout], (0, 3, 1, 2))


def _reference(x_nchw, weight, gamma, beta, running_mean, running_var,
               *, stride, dilation=1, eps=1e-5):
    """Pure-JAX reference (ceil_mode=True, count_include_pad=False), f32 math."""
    N, Cin, H, W = x_nchw.shape
    Cout = weight.shape[0]
    if isinstance(dilation, (tuple, list)):
        dil_is_one = all(int(d) == 1 for d in dilation)
    else:
        dil_is_one = (dilation == 1)
    sh, sw = _as_pair(stride) if dil_is_one else (1, 1)
    Ho, Wo = -(-H // sh), -(-W // sw)
    pad = ((0, 0), (0, 0), (0, Ho * sh - H), (0, Wo * sw - W))
    win = (1, 1, sh, sw)
    xf = x_nchw.astype(jnp.float32)
    summed = lax.reduce_window(xf, 0.0, lax.add, win, win, pad)
    counts = lax.reduce_window(jnp.ones_like(xf), 0.0, lax.add, win, win, pad)
    pooled = summed / counts
    y = jnp.einsum('nchw,oc->nohw', pooled,
                   weight.reshape(Cout, Cin).astype(jnp.float32))
    scale = gamma / jnp.sqrt(running_var + eps)
    shift = beta - running_mean * scale
    return y * scale[None, :, None, None] + shift[None, :, None, None]


if __name__ == "__main__":
    key = jax.random.PRNGKey(0)
    keys = jax.random.split(key, 6)

    N, Cin, Cout, stride = 2, 4, 8, 2
    weight = jax.random.normal(keys[1], (Cout, Cin, 1, 1), jnp.float32) * 0.1
    gamma = 1.0 + 0.1 * jax.random.normal(keys[2], (Cout,), jnp.float32)
    beta = 0.1 * jax.random.normal(keys[3], (Cout,), jnp.float32)
    running_mean = 0.1 * jax.random.normal(keys[4], (Cout,), jnp.float32)
    running_var = jnp.abs(jax.random.normal(keys[5], (Cout,), jnp.float32)) + 0.5
    params = (weight, gamma, beta, running_mean, running_var)

    # --- case 1: divisible spatial dims, multiple row tiles (row_tile=4 -> grid (2,2)) ---
    H = W = 16
    x = jax.random.normal(keys[0], (N, Cin, H, W), jnp.float32)
    out = res_a_down_block(x, *params, stride=stride, dilation=1, row_tile=4)
    out = jax.block_until_ready(out)
    ref = _reference(x, *params, stride=stride, dilation=1)
    assert out.shape == (N, Cout, H // stride, W // stride), out.shape
    # bf16 MXU inputs with f32 accumulation -> loosened tolerance vs f32 reference
    assert jnp.allclose(out, ref, atol=2e-2, rtol=2e-2), \
        float(jnp.max(jnp.abs(out - ref)))

    # --- case 2: ceil_mode ragged edge (H % s != 0), count_include_pad=False path ---
    H2 = W2 = 15
    x2 = jax.random.normal(keys[2], (N, Cin, H2, W2), jnp.float32)
    out2 = res_a_down_block(x2, *params, stride=stride, dilation=1, row_tile=2)
    out2 = jax.block_until_ready(out2)
    ref2 = _reference(x2, *params, stride=stride, dilation=1)
    assert out2.shape == (N, Cout, 8, 8), out2.shape
    assert jnp.allclose(out2, ref2, atol=2e-2, rtol=2e-2), \
        float(jnp.max(jnp.abs(out2 - ref2)))

    print("KERNEL_OK")
</pallas_src>

<mosaic_0001>
module attributes {stable_mosaic.version = 11 : i64} {
  func.func @_res_a_down_kernel(%arg0: i32, %arg1: i32, %arg2: memref<1x2x2x4x8x4xf32, #tpu.memory_space<vmem>>, %arg3: memref<4x128xbf16, #tpu.memory_space<vmem>>, %arg4: memref<1x128xf32, #tpu.memory_space<vmem>>, %arg5: memref<1x128xf32, #tpu.memory_space<vmem>>, %arg6: memref<1x4x8x128xf32, #tpu.memory_space<vmem>>) attributes {dimension_semantics = [#tpu.dimension_semantics<parallel>, #tpu.dimension_semantics<parallel>], iteration_bounds = array<i64: 2, 2>, scalar_prefetch = 0 : i64, scratch_operands = 0 : i64, tpu.core_type = #tpu.core_type<tc>, window_params = [{transform_indices = @transform_0, window_bounds = array<i64: 1, 2, 2, 4, 8, 4>}, {pipeline_mode = #tpu.pipeline_mode<synchronous>, transform_indices = @transform_1, window_bounds = array<i64: 4, 128>}, {pipeline_mode = #tpu.pipeline_mode<synchronous>, transform_indices = @transform_2, window_bounds = array<i64: 1, 128>}, {pipeline_mode = #tpu.pipeline_mode<synchronous>, transform_indices = @transform_3, window_bounds = array<i64: 1, 128>}, {transform_indices = @transform_4, window_bounds = array<i64: 1, 4, 8, 128>}]} {
    %c0 = arith.constant 0 : index
    %c0_0 = arith.constant 0 : index
    %c0_1 = arith.constant 0 : index
    %c0_2 = arith.constant 0 : index
    %c0_3 = arith.constant 0 : index
    %c0_4 = arith.constant 0 : index
    %0 = vector.load %arg2[%c0, %c0_0, %c0_1, %c0_2, %c0_3, %c0_4] : memref<1x2x2x4x8x4xf32, #tpu.memory_space<vmem>>, vector<1x1x1x4x8x4xf32>
    %1 = vector.shape_cast %0 : vector<1x1x1x4x8x4xf32> to vector<4x8x4xf32>
    %c0_5 = arith.constant 0 : index
    %c0_6 = arith.constant 0 : index
    %c1 = arith.constant 1 : index
    %c0_7 = arith.constant 0 : index
    %c0_8 = arith.constant 0 : index
    %c0_9 = arith.constant 0 : index
    %2 = vector.load %arg2[%c0_5, %c0_6, %c1, %c0_7, %c0_8, %c0_9] : memref<1x2x2x4x8x4xf32, #tpu.memory_space<vmem>>, vector<1x1x1x4x8x4xf32>
    %3 = vector.shape_cast %2 : vector<1x1x1x4x8x4xf32> to vector<4x8x4xf32>
    %4 = arith.addf %1, %3 : vector<4x8x4xf32>
    %c0_10 = arith.constant 0 : index
    %c1_11 = arith.constant 1 : index
    %c0_12 = arith.constant 0 : index
    %c0_13 = arith.constant 0 : index
    %c0_14 = arith.constant 0 : index
    %c0_15 = arith.constant 0 : index
    %5 = vector.load %arg2[%c0_10, %c1_11, %c0_12, %c0_13, %c0_14, %c0_15] : memref<1x2x2x4x8x4xf32, #tpu.memory_space<vmem>>, vector<1x1x1x4x8x4xf32>
    %6 = vector.shape_cast %5 : vector<1x1x1x4x8x4xf32> to vector<4x8x4xf32>
    %7 = arith.addf %4, %6 : vector<4x8x4xf32>
    %c0_16 = arith.constant 0 : index
    %c1_17 = arith.constant 1 : index
    %c1_18 = arith.constant 1 : index
    %c0_19 = arith.constant 0 : index
    %c0_20 = arith.constant 0 : index
    %c0_21 = arith.constant 0 : index
    %8 = vector.load %arg2[%c0_16, %c1_17, %c1_18, %c0_19, %c0_20, %c0_21] : memref<1x2x2x4x8x4xf32, #tpu.memory_space<vmem>>, vector<1x1x1x4x8x4xf32>
    %9 = vector.shape_cast %8 : vector<1x1x1x4x8x4xf32> to vector<4x8x4xf32>
    %10 = arith.addf %7, %9 : vector<4x8x4xf32>
    %c0_22 = arith.constant 0 : index
    %c0_23 = arith.constant 0 : index
    %11 = vector.load %arg3[%c0_22, %c0_23] : memref<4x128xbf16, #tpu.memory_space<vmem>>, vector<4x128xbf16>
    %12 = vector.shape_cast %10 : vector<4x8x4xf32> to vector<32x4xf32>
    %13 = arith.truncf %12 : vector<32x4xf32> to vector<32x4xbf16>
    %cst = arith.constant dense<0.000000e+00> : vector<32x128xf32>
    %14 = tpu.matmul %13, %11, %cst {dimension_numbers = #tpu.dot_dimension_numbers<[1], [0], [0], [1], [0, 0, 1, 1], [], []>} : vector<32x4xbf16>, vector<4x128xbf16>, vector<32x128xf32> -> vector<32x128xf32>
    %c0_24 = arith.constant 0 : index
    %c0_25 = arith.constant 0 : index
    %15 = vector.load %arg4[%c0_24, %c0_25] : memref<1x128xf32, #tpu.memory_space<vmem>>, vector<1x128xf32>
    %16 = vector.broadcast %15 : vector<1x128xf32> to vector<32x128xf32>
    %17 = arith.mulf %14, %16 : vector<32x128xf32>
    %c0_26 = arith.constant 0 : index
    %c0_27 = arith.constant 0 : index
    %18 = vector.load %arg5[%c0_26, %c0_27] : memref<1x128xf32, #tpu.memory_space<vmem>>, vector<1x128xf32>
    %19 = vector.broadcast %18 : vector<1x128xf32> to vector<32x128xf32>
    %20 = arith.addf %17, %19 : vector<32x128xf32>
    %21 = vector.shape_cast %20 : vector<32x128xf32> to vector<4x8x128xf32>
    %c0_28 = arith.constant 0 : index
    %c0_29 = arith.constant 0 : index
    %c0_30 = arith.constant 0 : index
    %c0_31 = arith.constant 0 : index
    %22 = vector.load %arg6[%c0_28, %c0_29, %c0_30, %c0_31] : memref<1x4x8x128xf32, #tpu.memory_space<vmem>>, vector<1x4x8x128xf32>
    %23 = vector.shape_cast %22 : vector<1x4x8x128xf32> to vector<4x8x128xf32>
    %24 = vector.shape_cast %21 : vector<4x8x128xf32> to vector<1x4x8x128xf32>
    tpu.vector_store %arg6[%c0_28, %c0_29, %c0_30, %c0_31], %24 {strides = array<i32>} : memref<1x4x8x128xf32, #tpu.memory_space<vmem>>, vector<1x4x8x128xf32>,
    return
  }
  func.func @transform_0(%arg0: i32, %arg1: i32) -> (i32, i32, i32, i32, i32, i32) {
    %c0_i32 = arith.constant 0 : i32
    %c0_i32_0 = arith.constant 0 : i32
    %c0_i32_1 = arith.constant 0 : i32
    %c0_i32_2 = arith.constant 0 : i32
    %c0_i32_3 = arith.constant 0 : i32
    return %arg0, %c0_i32, %c0_i32_0, %arg1, %c0_i32_1, %c0_i32_2 : i32, i32, i32, i32, i32, i32
  }
  func.func @transform_1(%arg0: i32, %arg1: i32) -> (i32, i32) {
    %c0_i32 = arith.constant 0 : i32
    %c0_i32_0 = arith.constant 0 : i32
    %c0_i32_1 = arith.constant 0 : i32
    return %c0_i32, %c0_i32_0 : i32, i32
  }
  func.func @transform_2(%arg0: i32, %arg1: i32) -> (i32, i32) {
    %c0_i32 = arith.constant 0 : i32
    %c0_i32_0 = arith.constant 0 : i32
    %c0_i32_1 = arith.constant 0 : i32
    return %c0_i32, %c0_i32_0 : i32, i32
  }
  func.func @transform_3(%arg0: i32, %arg1: i32) -> (i32, i32) {
    %c0_i32 = arith.constant 0 : i32
    %c0_i32_0 = arith.constant 0 : i32
    %c0_i32_1 = arith.constant 0 : i32
    return %c0_i32, %c0_i32_0 : i32, i32
  }
  func.func @transform_4(%arg0: i32, %arg1: i32) -> (i32, i32, i32, i32) {
    %c0_i32 = arith.constant 0 : i32
    %c0_i32_0 = arith.constant 0 : i32
    %c0_i32_1 = arith.constant 0 : i32
    return %arg0, %arg1, %c0_i32, %c0_i32_0 : i32, i32, i32, i32
  }
}

</mosaic_0001>

<llo_original>
// kernel: tpu_custom_call.1
$region0: #{tpu_custom_call.1}
  #allocation0 [shape = 'u32[]', space=smem, size = 0x4, offset = 0x4, fixed_abs, tag = 'smem constant byte address 0x4 - core index']
  #allocation1 [shape = 'u32[72,128]{1,0:T(1,128)}', space=vmem, size = 0x9000, scoped, tag = 'internal scratch']
  %s0 = inlined_call_operand.vmem [shape: f32[2,2,2,8,8,4], index: 0, kind: input, shape index: {}]
  %s1 = inlined_call_operand.vmem [shape: bf16[4,128], index: 1, kind: input, shape index: {}]
  %s2 = inlined_call_operand.vmem [shape: f32[1,128], index: 2, kind: input, shape index: {}]
  %s3 = inlined_call_operand.vmem [shape: f32[1,128], index: 3, kind: input, shape index: {}]
  %s4 = inlined_call_operand.hbm [shape: f32[2,8,8,128], index: 4, kind: output, shape index: {}]
  %s5 = sld [smem:[#allocation0]]
  $region87: #{tpu_custom_call.1} parent=0
    _
  %s7 = ssub.s32 1, %s5
  %s8 = scalar_select 0, %s7, %s5
  $region1: #{tpu_custom_call.1} parent=0
    #allocation2 [shape = 'u8[131072]{0}', space=vmem, size = 0x20000, scoped, tag = 'input window, operand 0']
    #allocation3 [shape = 'u8[32768]{0}', space=vmem, size = 0x8000, scoped, tag = 'output window, operand 0']
    #allocation4 [shape = 's32[2]{0}', space=sflag, size = 0x8, scoped, tag = 'scoped memory for tpu_custom_call.1']
    %9 = vsyncpa [#allocation4], 0
    %s10 = scalar_lea.sflag [#allocation4], 1
    %11 = vsyncpa %s10, 0
    loop: start=0, step=1, limit=6
    $region2: #{tpu_custom_call.1} parent=1 // loop_pre_header
      _
    $region3: #{tpu_custom_call.1} parent=1 // loop_header
      %s13 = sphi 0, %s17
      %p14 = scmp.ge.s32.totalorder %s13, 6
      %s20 = sphi 0, %s32
      %s21 = sphi 0, %s28
      %s22 = sphi 0, %s20
      %s23 = sphi 0, %s21
      %s24 = sphi 0, %s22
      %s25 = sphi 0, %s23
      %s37 = sphi 0, %s39
      %s40 = sphi 0, %s37
      %s41 = sphi 0, %s40
      %s57 = sphi 0, %s41
      %s61 = sphi 0, %s61
      %s63 = sphi 0, %s61
      %s64 = sphi 0, %s63
      %s78 = sphi 0, %s64
      %s82 = sphi 0, %s82
      %s84 = sphi 0, %s82
      %s85 = sphi 0, %s84
      %s99 = sphi 0, %s85
      %s103 = sphi 0, %s103
      %s105 = sphi 0, %s103
      %s106 = sphi 0, %s105
      %s120 = sphi 0, %s106
      %s128 = sphi 0, %s130
      %s131 = sphi 0, %s128
      %s132 = sphi 0, %s131
      %s148 = sphi 0, %s132
    $region4: #{tpu_custom_call.1} parent=1 // loop_header_branch
      %16 = sbr.rel (%p14) target = $region8
    $region5: #{tpu_custom_call.1} parent=1 // loop_body
      %s18 = ssub.s32 %s13, 1
      %s19 = ssub.s32 %s13, 2
      %s26 = sadd.s32 1, %s21
      %p27 = scmp.ge.s32.totalorder %s26, 2
      %s28 = scalar_select %p27, 0, %s26
      %s29 = sadd.s32 1, %s20
      %s30 = scalar_select %p27, %s29, %s20
      %p31 = scmp.ge.s32.totalorder %s30, 2
      %s32 = scalar_select %p31, 0, %s30
      %s33 = ssub.s32 %s20, %s32
      %s34 = ssub.s32 %s21, %s28
      %s35 = sor.u32 %s33, %s34
      %p36 = scmp.eq.s32.totalorder %s35, 0
      %s38 = sadd.s32 %s37, 1
      %s39 = scalar_select %p36, %s37, %s38
      %p42 = pneg %p36
      %p43 = scmp.eq.s32.totalorder %s13, 3
      %p44 = por %p42, %p43
      %p45 = scmp.ne.s32.totalorder %s37, %s40
      %p46 = scmp.eq.s32.totalorder %s13, 0
      %p47 = por %p45, %p46
      %p48 = scmp.ne.s32.totalorder %s37, %s40
      %p49 = scmp.eq.s32.totalorder %s18, 3
      %p50 = por %p48, %p49
      %p51 = scmp.ne.s32.totalorder %s40, %s41
      %p52 = scmp.eq.s32.totalorder %s18, 0
      %p53 = por %p51, %p52
      %p54 = scmp.ne.s32.totalorder %s40, %s41
      %p55 = scmp.eq.s32.totalorder %s19, 3
      %p56 = por %p54, %p55
      %p58 = scmp.ne.s32.totalorder %s41, %s57
      %p59 = scmp.eq.s32.totalorder %s19, 0
      %p60 = por %p58, %p59
      %s62 = sadd.s32 %s61, 1
      %p65 = scmp.eq.s32.totalorder %s13, 3
      %p66 = scmp.ne.s32.totalorder %s61, %s63
      %p67 = scmp.eq.s32.totalorder %s13, 0
      %p68 = por %p66, %p67
      %p69 = scmp.ne.s32.totalorder %s61, %s63
      %p70 = scmp.eq.s32.totalorder %s18, 3
      %p71 = por %p69, %p70
      %p72 = scmp.ne.s32.totalorder %s63, %s64
      %p73 = scmp.eq.s32.totalorder %s18, 0
      %p74 = por %p72, %p73
      %p75 = scmp.ne.s32.totalorder %s63, %s64
      %p76 = scmp.eq.s32.totalorder %s19, 3
      %p77 = por %p75, %p76
      %p79 = scmp.ne.s32.totalorder %s64, %s78
      %p80 = scmp.eq.s32.totalorder %s19, 0
      %p81 = por %p79, %p80
      %s83 = sadd.s32 %s82, 1
      %p86 = scmp.eq.s32.totalorder %s13, 3
      %p87 = scmp.ne.s32.totalorder %s82, %s84
      %p88 = scmp.eq.s32.totalorder %s13, 0
      %p89 = por %p87, %p88
      %p90 = scmp.ne.s32.totalorder %s82, %s84
      %p91 = scmp.eq.s32.totalorder %s18, 3
      %p92 = por %p90, %p91
      %p93 = scmp.ne.s32.totalorder %s84, %s85
      %p94 = scmp.eq.s32.totalorder %s18, 0
      %p95 = por %p93, %p94
      %p96 = scmp.ne.s32.totalorder %s84, %s85
      %p97 = scmp.eq.s32.totalorder %s19, 3
      %p98 = por %p96, %p97
      %p100 = scmp.ne.s32.totalorder %s85, %s99
      %p101 = scmp.eq.s32.totalorder %s19, 0
      %p102 = por %p100, %p101
      %s104 = sadd.s32 %s103, 1
      %p107 = scmp.eq.s32.totalorder %s13, 3
      %p108 = scmp.ne.s32.totalorder %s103, %s105
      %p109 = scmp.eq.s32.totalorder %s13, 0
      %p110 = por %p108, %p109
      %p111 = scmp.ne.s32.totalorder %s103, %s105
      %p112 = scmp.eq.s32.totalorder %s18, 3
      %p113 = por %p111, %p112
      %p114 = scmp.ne.s32.totalorder %s105, %s106
      %p115 = scmp.eq.s32.totalorder %s18, 0
      %p116 = por %p114, %p115
      %p117 = scmp.ne.s32.totalorder %s105, %s106
      %p118 = scmp.eq.s32.totalorder %s19, 3
      %p119 = por %p117, %p118
      %p121 = scmp.ne.s32.totalorder %s106, %s120
      %p122 = scmp.eq.s32.totalorder %s19, 0
      %p123 = por %p121, %p122
      %s124 = ssub.s32 %s20, %s32
      %s125 = ssub.s32 %s21, %s28
      %s126 = sor.u32 %s124, %s125
      %p127 = scmp.eq.s32.totalorder %s126, 0
      %s129 = sadd.s32 %s128, 1
      %s130 = scalar_select %p127, %s128, %s129
      %p133 = pneg %p127
      %p134 = scmp.eq.s32.totalorder %s13, 3
      %p135 = por %p133, %p134
      %p136 = scmp.ne.s32.totalorder %s128, %s131
      %p137 = scmp.eq.s32.totalorder %s13, 0
      %p138 = por %p136, %p137
      %p139 = scmp.ne.s32.totalorder %s128, %s131
      %p140 = scmp.eq.s32.totalorder %s18, 3
      %p141 = por %p139, %p140
      %p142 = scmp.ne.s32.totalorder %s131, %s132
      %p143 = scmp.eq.s32.totalorder %s18, 0
      %p144 = por %p142, %p143
      %p145 = scmp.ne.s32.totalorder %s131, %s132
      %p146 = scmp.eq.s32.totalorder %s19, 3
      %p147 = por %p145, %p146
      %p149 = scmp.ne.s32.totalorder %s132, %s148
      %p150 = scmp.eq.s32.totalorder %s19, 0
      %p151 = por %p149, %p150
      %p152 = scmp.le.s32.totalorder 1, %s13
      %p153 = scmp.lt.s32.totalorder %s13, 5
      %p154 = pnand %p152, %p153
      %p155 = pneg %p154
      // Predicated region
      $region9: #{tpu_custom_call.1} parent=5 // pred_check
        _
      $region10: #{tpu_custom_call.1} parent=5 // pred_check_branch
        %157 = sbr.rel (%p154) target = $region12
      $region11: #{tpu_custom_call.1} parent=5 // pred_region
        %s158 = ssub.s32 %s13, 1
        // Predicated region
        $region13: #{tpu_custom_call.1} parent=11 // pred_check
          %p159 = pneg %p74
        $region14: #{tpu_custom_call.1} parent=11 // pred_check_branch
          %161 = sbr.rel (%p159) target = $region16
        $region15: #{tpu_custom_call.1} parent=11 // pred_region
          _
        $region16: #{tpu_custom_call.1} parent=11 // pred_fallthru
          _
        // Predicated region
        $region17: #{tpu_custom_call.1} parent=11 // pred_check
          %p162 = pneg %p95
        $region18: #{tpu_custom_call.1} parent=11 // pred_check_branch
          %164 = sbr.rel (%p162) target = $region20
        $region19: #{tpu_custom_call.1} parent=11 // pred_region
          _
        $region20: #{tpu_custom_call.1} parent=11 // pred_fallthru
          _
        // Predicated region
        $region21: #{tpu_custom_call.1} parent=11 // pred_check
          %p165 = pneg %p116
        $region22: #{tpu_custom_call.1} parent=11 // pred_check_branch
          %167 = sbr.rel (%p165) target = $region24
        $region23: #{tpu_custom_call.1} parent=11 // pred_region
          _
        $region24: #{tpu_custom_call.1} parent=11 // pred_fallthru
          _
      $region12: #{tpu_custom_call.1} parent=5 // pred_fallthru
        _
      %p168 = scmp.lt.s32.totalorder %s13, 4
      // Predicated region
      $region25: #{tpu_custom_call.1} parent=5 // pred_check
        %p169 = pneg %p168
      $region26: #{tpu_custom_call.1} parent=5 // pred_check_branch
        %171 = sbr.rel (%p169) target = $region28
      $region27: #{tpu_custom_call.1} parent=5 // pred_region
        // Predicated region
        $region29: #{tpu_custom_call.1} parent=27 // pred_check
          %p172 = pneg %p47
        $region30: #{tpu_custom_call.1} parent=27 // pred_check_branch
          %174 = sbr.rel (%p172) target = $region32
        $region31: #{tpu_custom_call.1} parent=27 // pred_region
          %s175 = sand.u32 %s37, 1
          %s176 = sand.u32 %s37, 1
          %s177 = smul.addr %s176, 128
          %s178 = scalar_lea.vmem [#allocation2], %s177
          %s179 = smul.u32 4, %s21
          %s180 = smul.addr %s20, 32
          %s181 = sadd.s32 %s179, %s180
          %s182 = smul.addr %s181, 8
          %s183 = scalar_lea.vmem %s0, %s182
          // Predicated region
          $region33: #{tpu_custom_call.1} parent=31 // pred_check
            _
          $region34: #{tpu_custom_call.1} parent=31 // pred_check_branch
            %185 = sbr.rel (0) target = $region36
          $region35: #{tpu_custom_call.1} parent=31 // pred_region
            // Predicated region
            $region37: #{tpu_custom_call.1} parent=35 // pred_check
              _
            $region38: #{tpu_custom_call.1} parent=35 // pred_check_branch
              %187 = sbr.rel (0) target = $region40
            $region39: #{tpu_custom_call.1} parent=35 // pred_region
              // Predicated region
              $region52: #{tpu_custom_call.1} parent=39 // pred_check
                _
              $region53: #{tpu_custom_call.1} parent=39 // pred_check_branch
                %233 = sbr.rel (0) target = $region55
              $region54: #{tpu_custom_call.1} parent=39 // pred_region
                loop: start=0, step=1, limit=1
                $region56: #{tpu_custom_call.1} parent=54 // loop_pre_header
                  _
                $region57: #{tpu_custom_call.1} parent=54 // loop_header
                  %s235 = sphi 0, %s239
                  %p236 = scmp.ge.s32.totalorder %s235, 1
                  %s240 = sphi %s183, %s183
                  %s241 = sphi %s178, %s178
                $region58: #{tpu_custom_call.1} parent=54 // loop_header_branch
                  %238 = sbr.rel (%p236) target = $region62
                $region59: #{tpu_custom_call.1} parent=54 // loop_body
                  %v242 = vld [vmem:[%s240] sm:$0xff]
                  %243 = vst [vmem:[%s241] sm:$0xff] %v242
                  %v244 = vld [vmem:[%s240 + $0x8] sm:$0xff]
                  %245 = vst [vmem:[%s241 + $0x8] sm:$0xff] %v244
                  %v246 = vld [vmem:[%s240 + $0x10] sm:$0xff]
                  %247 = vst [vmem:[%s241 + $0x10] sm:$0xff] %v246
                  %v248 = vld [vmem:[%s240 + $0x18] sm:$0xff]
                  %249 = vst [vmem:[%s241 + $0x18] sm:$0xff] %v248
                  %v250 = vld [vmem:[%s240 + $0x40] sm:$0xff]
                  %251 = vst [vmem:[%s241 + $0x20] sm:$0xff] %v250
                  %v252 = vld [vmem:[%s240 + $0x48] sm:$0xff]
                  %253 = vst [vmem:[%s241 + $0x28] sm:$0xff] %v252
                  %v254 = vld [vmem:[%s240 + $0x50] sm:$0xff]
                  %255 = vst [vmem:[%s241 + $0x30] sm:$0xff] %v254
                  %v256 = vld [vmem:[%s240 + $0x58] sm:$0xff]
                  %257 = vst [vmem:[%s241 + $0x38] sm:$0xff] %v256
                  %v258 = vld [vmem:[%s240 + $0x80] sm:$0xff]
                  %259 = vst [vmem:[%s241 + $0x40] sm:$0xff] %v258
                  %v260 = vld [vmem:[%s240 + $0x88] sm:$0xff]
                  %261 = vst [vmem:[%s241 + $0x48] sm:$0xff] %v260
                  %v262 = vld [vmem:[%s240 + $0x90] sm:$0xff]
                  %263 = vst [vmem:[%s241 + $0x50] sm:$0xff] %v262
                  %v264 = vld [vmem:[%s240 + $0x98] sm:$0xff]
                  %265 = vst [vmem:[%s241 + $0x58] sm:$0xff] %v264
                  %v266 = vld [vmem:[%s240 + $0xc0] sm:$0xff]
                  %267 = vst [vmem:[%s241 + $0x60] sm:$0xff] %v266
                  %v268 = vld [vmem:[%s240 + $0xc8] sm:$0xff]
                  %269 = vst [vmem:[%s241 + $0x68] sm:$0xff] %v268
                  %v270 = vld [vmem:[%s240 + $0xd0] sm:$0xff]
                  %271 = vst [vmem:[%s241 + $0x70] sm:$0xff] %v270
                  %v272 = vld [vmem:[%s240 + $0xd8] sm:$0xff]
                  %273 = vst [vmem:[%s241 + $0x78] sm:$0xff] %v272
                $region60: #{tpu_custom_call.1} parent=54 // loop_footer
                  %s239 = sadd.s32 1, %s235
                $region61: #{tpu_custom_call.1} parent=54 // loop_footer_branch
                  %234 = sbr.rel target = $region57
                $region62: #{tpu_custom_call.1} parent=54 // loop_exit
                  _
              $region55: #{tpu_custom_call.1} parent=39 // pred_fallthru
                _
              // Predicated region
              $region63: #{tpu_custom_call.1} parent=39 // pred_check
                _
              $region64: #{tpu_custom_call.1} parent=39 // pred_check_branch
                %275 = sbr.rel target = $region66
              $region65: #{tpu_custom_call.1} parent=39 // pred_region
                _
              $region66: #{tpu_custom_call.1} parent=39 // pred_fallthru
                _
            $region40: #{tpu_custom_call.1} parent=35 // pred_fallthru
              _
            // Predicated region
            $region41: #{tpu_custom_call.1} parent=35 // pred_check
              _
            $region42: #{tpu_custom_call.1} parent=35 // pred_check_branch
              %189 = sbr.rel target = $region44
            $region43: #{tpu_custom_call.1} parent=35 // pred_region
              %s191 = ssub.s32 256, 1
              loop: start=0, step=1, limit=1
              $region45: #{tpu_custom_call.1} parent=43 // loop_pre_header
                _
              $region46: #{tpu_custom_call.1} parent=43 // loop_header
                %s193 = sphi 0, %s197
                %p194 = scmp.ge.s32.totalorder %s193, 1
                %s198 = sphi %s183, %s183
                %s199 = sphi %s178, %s178
              $region47: #{tpu_custom_call.1} parent=43 // loop_header_branch
                %196 = sbr.rel (%p194) target = $region51
              $region48: #{tpu_custom_call.1} parent=43 // loop_body
                %v200 = vld [vmem:[%s198] sm:%s191]
                %201 = vst [vmem:[%s199] sm:%s191] %v200
                %v202 = vld [vmem:[%s198 + $0x8] sm:%s191]
                %203 = vst [vmem:[%s199 + $0x8] sm:%s191] %v202
                %v204 = vld [vmem:[%s198 + $0x10] sm:%s191]
                %205 = vst [vmem:[%s199 + $0x10] sm:%s191] %v204
                %v206 = vld [vmem:[%s198 + $0x18] sm:%s191]
                %207 = vst [vmem:[%s199 + $0x18] sm:%s191] %v206
                %v208 = vld [vmem:[%s198 + $0x40] sm:%s191]
                %209 = vst [vmem:[%s199 + $0x20] sm:%s191] %v208
                %v210 = vld [vmem:[%s198 + $0x48] sm:%s191]
                %211 = vst [vmem:[%s199 + $0x28] sm:%s191] %v210
                %v212 = vld [vmem:[%s198 + $0x50] sm:%s191]
                %213 = vst [vmem:[%s199 + $0x30] sm:%s191] %v212
                %v214 = vld [vmem:[%s198 + $0x58] sm:%s191]
                %215 = vst [vmem:[%s199 + $0x38] sm:%s191] %v214
                %v216 = vld [vmem:[%s198 + $0x80] sm:%s191]
                %217 = vst [vmem:[%s199 + $0x40] sm:%s191] %v216
                %v218 = vld [vmem:[%s198 + $0x88] sm:%s191]
                %219 = vst [vmem:[%s199 + $0x48] sm:%s191] %v218
                %v220 = vld [vmem:[%s198 + $0x90] sm:%s191]
                %221 = vst [vmem:[%s199 + $0x50] sm:%s191] %v220
                %v222 = vld [vmem:[%s198 + $0x98] sm:%s191]
                %223 = vst [vmem:[%s199 + $0x58] sm:%s191] %v222
                %v224 = vld [vmem:[%s198 + $0xc0] sm:%s191]
                %225 = vst [vmem:[%s199 + $0x60] sm:%s191] %v224
                %v226 = vld [vmem:[%s198 + $0xc8] sm:%s191]
                %227 = vst [vmem:[%s199 + $0x68] sm:%s191] %v226
                %v228 = vld [vmem:[%s198 + $0xd0] sm:%s191]
                %229 = vst [vmem:[%s199 + $0x70] sm:%s191] %v228
                %v230 = vld [vmem:[%s198 + $0xd8] sm:%s191]
                %231 = vst [vmem:[%s199 + $0x78] sm:%s191] %v230
              $region49: #{tpu_custom_call.1} parent=43 // loop_footer
                %s197 = sadd.s32 1, %s193
              $region50: #{tpu_custom_call.1} parent=43 // loop_footer_branch
                %192 = sbr.rel target = $region46
              $region51: #{tpu_custom_call.1} parent=43 // loop_exit
                _
            $region44: #{tpu_custom_call.1} parent=35 // pred_fallthru
              _
          $region36: #{tpu_custom_call.1} parent=31 // pred_fallthru
            _
          %276 = vnop
        $region32: #{tpu_custom_call.1} parent=27 // pred_fallthru
          _
      $region28: #{tpu_custom_call.1} parent=5 // pred_fallthru
        _
      %p277 = scmp.le.s32.totalorder 1, %s13
      %p278 = scmp.lt.s32.totalorder %s13, 5
      %p279 = pnand %p277, %p278
      %p280 = pneg %p279
      // Predicated region
      $region67: #{tpu_custom_call.1} parent=5 // pred_check
        _
      $region68: #{tpu_custom_call.1} parent=5 // pred_check_branch
        %282 = sbr.rel (%p279) target = $region70
      $region69: #{tpu_custom_call.1} parent=5 // pred_region
        %s283 = ssub.s32 %s13, 1
        %s284 = sand.u32 %s40, 1
        %s285 = sand.u32 %s40, 1
        %s286 = smul.addr %s285, 128
        %s287 = scalar_lea.vmem [#allocation2], %s286
        // Predicated region
        $region71: #{tpu_custom_call.1} parent=69 // pred_check
          %p288 = pneg %p53
        $region72: #{tpu_custom_call.1} parent=69 // pred_check_branch
          %290 = sbr.rel (%p288) target = $region74
        $region73: #{tpu_custom_call.1} parent=69 // pred_region
          _
        $region74: #{tpu_custom_call.1} parent=69 // pred_fallthru
          _
        %s291 = sand.u32 %s40, 1
        %s292 = sand.u32 %s40, 1
        %s293 = smul.addr %s292, 128
        %s294 = scalar_lea.vmem [#allocation2], %s293
        %p295 = pneg %p53
        %p296 = pneg %p50
        %p297 = pneg %p74
        %p298 = pneg %p71
        %p299 = pneg %p95
        %p300 = pneg %p92
        %p301 = pneg %p116
        %p302 = pneg %p113
        %p303 = pneg %p144
        %p304 = pneg %p141
        %s305 = sand.u32 %s131, 1
        %s306 = scalar_lea.sflag [#allocation4], %s305
        %s307 = sand.u32 %s131, 1
        %s308 = smul.addr %s307, 32
        %s309 = scalar_lea.vmem [#allocation3], %s308
        %s310 = smul.u32 4, %s23
        %s311 = smul.u32 4, %s23
        %v313 = vld [vmem:[%s287] sm:$0xff]
        %v314 = vld [vmem:[%s287 + $0x8] sm:$0xff]
        %v315 = vld [vmem:[%s287 + $0x10] sm:$0xff]
        %v316 = vld [vmem:[%s287 + $0x18] sm:$0xff]
        %s317 = scalar_lea.vmem %s287, 32 [#allocation2]
        %v318 = vld [vmem:[%s317] sm:$0xff]
        %v319 = vld [vmem:[%s317 + $0x8] sm:$0xff]
        %v320 = vld [vmem:[%s317 + $0x10] sm:$0xff]
        %v321 = vld [vmem:[%s317 + $0x18] sm:$0xff]
        %v322 = vadd.f32 %v313, %v318
        %v323 = vadd.f32 %v314, %v319
        %v324 = vadd.f32 %v315, %v320
        %v325 = vadd.f32 %v316, %v321
        %s326 = scalar_lea.vmem %s287, 64 [#allocation2]
        %v327 = vld [vmem:[%s326] sm:$0xff]
        %v328 = vld [vmem:[%s326 + $0x8] sm:$0xff]
        %v329 = vld [vmem:[%s326 + $0x10] sm:$0xff]
        %v330 = vld [vmem:[%s326 + $0x18] sm:$0xff]
        %v331 = vadd.f32 %v322, %v327
        %v332 = vadd.f32 %v323, %v328
        %v333 = vadd.f32 %v324, %v329
        %v334 = vadd.f32 %v325, %v330
        %s335 = scalar_lea.vmem %s287, 96 [#allocation2]
        %v336 = vld [vmem:[%s335] sm:$0xff]
        %v337 = vld [vmem:[%s335 + $0x8] sm:$0xff]
        %v338 = vld [vmem:[%s335 + $0x10] sm:$0xff]
        %v339 = vld [vmem:[%s335 + $0x18] sm:$0xff]
        %v340 = vadd.f32 %v331, %v336
        %v341 = vadd.f32 %v332, %v337
        %v342 = vadd.f32 %v333, %v338
        %v343 = vadd.f32 %v334, %v339
        %v344 = vld [vmem:[%s1] sm:$0x3]
        %v345 = vpack.c.bf16 %v341, %v340
        %v346 = vpack.c.bf16 %v343, %v342
        %vm347 = vcmask 31744
        %v349 = vsel %vm347, %v345, 0
        %v352 = vsel %vm347, %v346, 0
        %vm354 = vcmask 1041408
        %v356 = vsel %vm354, %v344, 0
        %358 = vmatpush.bf16.msra.mxu0 0
        %359 = vmatpush.bf16.msra.mxu0 0
        %360 = vmatpush.bf16.msra.mxu0 0
        %361 = vmatpush.bf16.msra.mxu0 0
        %362 = vmatpush.bf16.msra.mxu0 0
        %363 = vmatpush.bf16.msra.mxu0 0
        %364 = vmatpush.bf16.msra.mxu0 0
        %365 = vmatpush.bf16.msra.mxu0 %v356
        %366 = vmatmul.bf16.gmra.mxu0 %v349
        %v367 = vpop.f32.mrf.mxu0
        %v368 = vadd.f32 0.0, %v367
        %v369 = vpop.f32.mrf.mxu0
        %v370 = vadd.f32 0.0, %v369
        %371 = vmatmul.bf16.gmra.mxu0 %v352
        %v372 = vpop.f32.mrf.mxu0
        %v373 = vadd.f32 0.0, %v372
        %v374 = vpop.f32.mrf.mxu0
        %v375 = vadd.f32 0.0, %v374
        %376 = vdwg.mxu0
        %v377 = vld [vmem:[%s2] sm:$0x1]
        %v379 = vperm.slane %v377, 0
        %v381 = vmul.f32 %v368, %v379
        %v382 = vmul.f32 %v370, %v379
        %v383 = vmul.f32 %v373, %v379
        %v384 = vmul.f32 %v375, %v379
        %v385 = vld [vmem:[%s3] sm:$0x1]
        %v387 = vperm.slane %v385, 0
        %v389 = vadd.f32 %v381, %v387
        %v390 = vadd.f32 %v382, %v387
        %v391 = vadd.f32 %v383, %v387
        %v392 = vadd.f32 %v384, %v387
        %393 = vst [vmem:[%s309] sm:$0xff] %v389
        %394 = vst [vmem:[%s309 + $0x8] sm:$0xff] %v390
        %395 = vst [vmem:[%s309 + $0x10] sm:$0xff] %v391
        %396 = vst [vmem:[%s309 + $0x18] sm:$0xff] %v392
        %s397 = sand.u32 %s131, 1
        %s398 = scalar_lea.sflag [#allocation4], %s397
        %s399 = sand.u32 %s131, 1
        %s400 = smul.addr %s399, 32
        %s401 = scalar_lea.vmem [#allocation3], %s400
        // Predicated region
        $region75: #{tpu_custom_call.1} parent=69 // pred_check
          %p402 = pneg %p141
        $region76: #{tpu_custom_call.1} parent=69 // pred_check_branch
          %404 = sbr.rel (%p402) target = $region78
        $region77: #{tpu_custom_call.1} parent=69 // pred_region
          %s405 = smul.u32 4, %s23
          %407 = vsyncadd %s398, 0
          %s408 = smul.addr %s22, 8
          %s409 = sadd.s32 %s405, %s408
          %s410 = smul.addr %s409, 8
          %s411 = scalar_lea.hbm %s4, %s410
          %s412 = sshll.u32 %s401, 4
          %s413 = int_to_ptr.vmem [resolvable:$true] %s412
          %s414 = sshll.u32 %s411, 4
          %s415 = int_to_ptr.hbm [resolvable:$true] %s414
          %420 = dma.vmem_to_hbm [thread:$0]  %s413, 512, %s415, %s398, 128, 128, 8
        $region78: #{tpu_custom_call.1} parent=69 // pred_fallthru
          _
      $region70: #{tpu_custom_call.1} parent=5 // pred_fallthru
        _
      %p421 = scmp.le.s32.totalorder 2, %s13
      // Predicated region
      $region79: #{tpu_custom_call.1} parent=5 // pred_check
        %p422 = pneg %p421
      $region80: #{tpu_custom_call.1} parent=5 // pred_check_branch
        %424 = sbr.rel (%p422) target = $region82
      $region81: #{tpu_custom_call.1} parent=5 // pred_region
        %s425 = ssub.s32 %s13, 2
        // Predicated region
        $region83: #{tpu_custom_call.1} parent=81 // pred_check
          %p426 = pneg %p147
        $region84: #{tpu_custom_call.1} parent=81 // pred_check_branch
          %428 = sbr.rel (%p426) target = $region86
        $region85: #{tpu_custom_call.1} parent=81 // pred_region
          %s429 = sand.u32 %s132, 1
          %s430 = scalar_lea.sflag [#allocation4], %s429
          %s431 = sand.u32 %s132, 1
          %s432 = smul.addr %s431, 32
          %s433 = scalar_lea.vmem [#allocation3], %s432
          %435 = dma.done %s430, 512
        $region86: #{tpu_custom_call.1} parent=81 // pred_fallthru
          _
      $region82: #{tpu_custom_call.1} parent=5 // pred_fallthru
        _
    $region6: #{tpu_custom_call.1} parent=1 // loop_footer
      %s17 = sadd.s32 1, %s13
    $region7: #{tpu_custom_call.1} parent=1 // loop_footer_branch
      %12 = sbr.rel target = $region3
    $region8: #{tpu_custom_call.1} parent=1 // loop_exit
      _
    %436 = vsyncpa [#allocation4], 1
    %s437 = scalar_lea.sflag [#allocation4], 1
    %438 = vsyncpa %s437, 1

</llo_original>
